<compile_context>
chip_gen: v6e
topology: v6e:2x2x1
jax: 0.10.0
libtpu: 0.0.40
codegen_flags: <defaults>
</compile_context>

<pallas_src>
import functools

import jax
import jax.numpy as jnp
from jax import lax
from jax.experimental import pallas as pl
from jax.experimental.pallas import tpu as pltpu


def _gcnmax_edge_kernel(r_ref, w_ref, b_ref, row_ref, col_ref, out_ref,
                        v_s_ref, agg_ref, *, k, k_pad):
    """Grid axis 0 = edge tiles (reduction).

    Step 0: compute v_s into scratch, zero the aggregation accumulator.
    Every step: two-step one-hot aggregation over the k_pad kept columns.
    Last step: concat (lane select) + bias + ReLU + mean over nodes.
    """
    e = pl.program_id(0)
    n_nodes = r_ref.shape[0]
    e_tile = row_ref.shape[1]

    @pl.when(e == 0)
    def _init():
        # v_s = r_s @ W in f32 (parity with the f32 PyTorch reference).
        v_s_ref[...] = jnp.dot(r_ref[...], w_ref[...],
                               preferred_element_type=jnp.float32)
        agg_ref[...] = jnp.zeros_like(agg_ref)

    if k > 0:
        # One-hot incidence matrices (exact 0/1 values).  Padded edges carry
        # sentinel index -1 and never match the node iota -> contribute zero.
        row = row_ref[...]                                       # [1, E_t] int32
        col = col_ref[...]                                       # [E_t, 1] int32
        row_oh = (lax.broadcasted_iota(jnp.int32, (n_nodes, e_tile), 0)
                  == row).astype(jnp.float32)                    # [N, E_t]
        col_oh_t = (lax.broadcasted_iota(jnp.int32, (e_tile, n_nodes), 1)
                    == col).astype(jnp.float32)                  # [E_t, N]
        # e_vals[e, :] = v_s[col[e], :k_pad]    (gather via one-hot matmul)
        e_vals = jnp.dot(col_oh_t, v_s_ref[:, 0:k_pad],
                         preferred_element_type=jnp.float32)     # [E_t, k_pad]
        # agg[n, :] += sum_{edges with row==n} e_vals[e, :]   (scatter-add)
        agg_ref[...] += jnp.dot(row_oh, e_vals,
                                preferred_element_type=jnp.float32)  # [N, k_pad]

    @pl.when(e == pl.num_programs(0) - 1)
    def _finalize():
        v_s = v_s_ref[...]                                       # [N, P_pad]
        if k > 0:
            # concat(agg[:, :k], v_s[:, k:]) as a full-width lane select: the
            # first k lanes come from agg, the rest from v_s (no masked
            # partial-slice stores, no VMEM round trip).
            lane = lax.broadcasted_iota(jnp.int32, (n_nodes, k_pad), 1)
            head = jnp.where(lane < k, agg_ref[...], v_s[:, 0:k_pad])
            if k_pad < v_s.shape[1]:
                combined = jnp.concatenate([head, v_s[:, k_pad:]], axis=1)
            else:
                combined = head
        else:
            combined = v_s
        combined = combined + b_ref[...]
        # TODO(synk): activation is a call-time callable in the PyTorch module;
        # ReLU is hard-wired here.
        i_s = jnp.maximum(combined, jnp.float32(0.0))
        out_ref[...] = jnp.mean(i_s, axis=0, keepdims=True)      # [1, P_pad]


@jax.jit
def gcnmax_edge_forward(r_s, weight_W, bias, edge_index):
    """r_s: [N, F], weight_W: [F, P], bias: [P], edge_index: [2, E] int."""
    N, F = r_s.shape
    P = weight_W.shape[1]
    E = edge_index.shape[1]
    k = P // 10

    # Lane-dense output / weight columns (unmasked final vst).
    P_pad = ((P + 127) // 128) * 128
    # Aggregation restricted to the concat-surviving columns, padded to 128
    # lanes so every matmul output is full-width.
    k_pad = min(((max(k, 1) + 127) // 128) * 128, P_pad)

    # Edge tiling: multiple of 256 (MXU depth), capped at 512, single grid
    # step for small E.  Padded edges get sentinel index -1 (contribute 0).
    E_TILE = max(256, min(512, ((E + 255) // 256) * 256))
    n_e_tiles = pl.cdiv(E, E_TILE)
    E_pad = n_e_tiles * E_TILE

    w = jnp.zeros((F, P_pad), jnp.float32).at[:, :P].set(weight_W.astype(jnp.float32))
    b = jnp.zeros((1, P_pad), jnp.float32).at[:, :P].set(bias.astype(jnp.float32)[None, :])
    row = jnp.full((1, E_pad), -1, jnp.int32).at[:, :E].set(
        edge_index[0].astype(jnp.int32)[None, :])
    col = jnp.full((E_pad, 1), -1, jnp.int32).at[:E, :].set(
        edge_index[1].astype(jnp.int32)[:, None])

    kernel = functools.partial(_gcnmax_edge_kernel, k=k, k_pad=k_pad)

    out = pl.pallas_call(
        kernel,
        out_shape=jax.ShapeDtypeStruct((1, P_pad), jnp.float32),
        grid_spec=pltpu.PrefetchScalarGridSpec(
            num_scalar_prefetch=0,
            grid=(n_e_tiles,),
            in_specs=[
                pl.BlockSpec((N, F), lambda e: (0, 0)),        # r_s   (resident)
                pl.BlockSpec((F, P_pad), lambda e: (0, 0)),    # W     (resident)
                pl.BlockSpec((1, P_pad), lambda e: (0, 0)),    # bias  (resident)
                pl.BlockSpec((1, E_TILE), lambda e: (0, e)),   # row edge tile
                pl.BlockSpec((E_TILE, 1), lambda e: (e, 0)),   # col edge tile
            ],
            out_specs=pl.BlockSpec((1, P_pad), lambda e: (0, 0)),
            scratch_shapes=[
                pltpu.VMEM((N, P_pad), jnp.float32),   # v_s  (computed at step 0)
                pltpu.VMEM((N, k_pad), jnp.float32),   # aggregation accumulator
            ],
        ),
        compiler_params=pltpu.CompilerParams(
            dimension_semantics=("arbitrary",),        # edge axis is a reduction
        ),
    )(r_s.astype(jnp.float32), w, b, row, col)
    return out[0, :P]


def _reference_forward(r_s, weight_W, bias, edge_index):
    """Pure-JAX f32 reference mirroring the PyTorch code (activation = ReLU)."""
    v_s = r_s @ weight_W
    row = edge_index[0].astype(jnp.int32)
    col = edge_index[1].astype(jnp.int32)
    output = jnp.zeros_like(v_s).at[row].add(v_s[col])
    kk = output.shape[1] // 10
    output = jnp.concatenate((output[:, :kk], v_s[:, kk:]), axis=1)
    output = output + bias
    i_s = jnp.maximum(output, 0.0)
    return jnp.mean(i_s, axis=0)


if __name__ == "__main__":
    N = 16             # number of nodes
    in_features = 32   # F
    print_length = 40  # P  (P // 10 == 4 columns come from the aggregated path)
    E = 200            # edges (single 256-wide edge tile -> one grid step)

    key = jax.random.PRNGKey(0)
    k_r, k_w, k_b, k_row, k_col = jax.random.split(key, 5)

    # Deterministic parameter init matching reset_parameters():
    stdv_b = 6.0 / (print_length ** 0.5)
    bias = jax.random.uniform(k_b, (print_length,), jnp.float32, -stdv_b, stdv_b)
    stdv_w = 6.0 / ((in_features + print_length) ** 0.5)
    weight_W = jax.random.uniform(
        k_w, (in_features, print_length), jnp.float32, -stdv_w, stdv_w)

    r_s = jax.random.normal(k_r, (N, in_features), jnp.float32)
    edge_index = jnp.stack([
        jax.random.randint(k_row, (E,), 0, N, dtype=jnp.int32),
        jax.random.randint(k_col, (E,), 0, N, dtype=jnp.int32),
    ], axis=0)  # [2, E]

    f = gcnmax_edge_forward(r_s, weight_W, bias, edge_index)
    f = jax.block_until_ready(f)

    f_ref = _reference_forward(r_s, weight_W, bias, edge_index)
    assert f.shape == (print_length,)
    # f32 operands throughout (no bf16 input casts); tolerance leaves margin
    # for MXU internal pass behavior across chip generations.
    assert jnp.allclose(f, f_ref, atol=1e-2, rtol=1e-2), (f, f_ref)

    print("KERNEL_OK")
</pallas_src>

<mosaic_0001>
module attributes {stable_mosaic.version = 11 : i64} {
  func.func @_gcnmax_edge_kernel(%arg0: i32, %arg1: memref<16x32xf32, #tpu.memory_space<vmem>>, %arg2: memref<32x128xf32, #tpu.memory_space<vmem>>, %arg3: memref<1x128xf32, #tpu.memory_space<vmem>>, %arg4: memref<1x256xi32, #tpu.memory_space<vmem>>, %arg5: memref<256x1xi32, #tpu.memory_space<vmem>>, %arg6: memref<1x128xf32, #tpu.memory_space<vmem>>, %arg7: memref<16x128xf32, #tpu.memory_space<vmem>>, %arg8: memref<16x128xf32, #tpu.memory_space<vmem>>) attributes {dimension_semantics = [#tpu.dimension_semantics<arbitrary>], iteration_bounds = array<i64: 1>, scalar_prefetch = 0 : i64, scratch_operands = 2 : i64, tpu.core_type = #tpu.core_type<tc>, window_params = [{pipeline_mode = #tpu.pipeline_mode<synchronous>, transform_indices = @transform_0, window_bounds = array<i64: 16, 32>}, {pipeline_mode = #tpu.pipeline_mode<synchronous>, transform_indices = @transform_1, window_bounds = array<i64: 32, 128>}, {pipeline_mode = #tpu.pipeline_mode<synchronous>, transform_indices = @transform_2, window_bounds = array<i64: 1, 128>}, {transform_indices = @transform_3, window_bounds = array<i64: 1, 256>}, {transform_indices = @transform_4, window_bounds = array<i64: 256, 1>}, {pipeline_mode = #tpu.pipeline_mode<synchronous>, transform_indices = @transform_5, window_bounds = array<i64: 1, 128>}]} {
    %c0_i32 = arith.constant 0 : i32
    %0 = arith.cmpi eq, %arg0, %c0_i32 : i32
    %1 = arith.extui %0 : i1 to i32
    %c0_i32_0 = arith.constant 0 : i32
    %2 = arith.cmpi ne, %1, %c0_i32_0 : i32
    scf.if %2 {
      %c0_13 = arith.constant 0 : index
      %c0_14 = arith.constant 0 : index
      %24 = vector.load %arg1[%c0_13, %c0_14] : memref<16x32xf32, #tpu.memory_space<vmem>>, vector<16x32xf32>
      %c0_15 = arith.constant 0 : index
      %c0_16 = arith.constant 0 : index
      %25 = vector.load %arg2[%c0_15, %c0_16] : memref<32x128xf32, #tpu.memory_space<vmem>>, vector<32x128xf32>
      %cst_17 = arith.constant dense<0.000000e+00> : vector<16x128xf32>
      %26 = tpu.matmul %24, %25, %cst_17 {dimension_numbers = #tpu.dot_dimension_numbers<[1], [0], [0], [1], [0, 0, 1, 1], [], []>} : vector<16x32xf32>, vector<32x128xf32>, vector<16x128xf32> -> vector<16x128xf32>
      %c0_18 = arith.constant 0 : index
      %c0_19 = arith.constant 0 : index
      %27 = vector.load %arg7[%c0_18, %c0_19] : memref<16x128xf32, #tpu.memory_space<vmem>>, vector<16x128xf32>
      tpu.vector_store %arg7[%c0_18, %c0_19], %26 {strides = array<i32>} : memref<16x128xf32, #tpu.memory_space<vmem>>, vector<16x128xf32>,
      %cst_20 = arith.constant 0.000000e+00 : f32
      %28 = vector.broadcast %cst_20 : f32 to vector<16x128xf32>
      %c0_21 = arith.constant 0 : index
      %c0_22 = arith.constant 0 : index
      %29 = vector.load %arg8[%c0_21, %c0_22] : memref<16x128xf32, #tpu.memory_space<vmem>>, vector<16x128xf32>
      tpu.vector_store %arg8[%c0_21, %c0_22], %28 {strides = array<i32>} : memref<16x128xf32, #tpu.memory_space<vmem>>, vector<16x128xf32>,
    } else {
    }
    %c0 = arith.constant 0 : index
    %c0_1 = arith.constant 0 : index
    %3 = vector.load %arg4[%c0, %c0_1] : memref<1x256xi32, #tpu.memory_space<vmem>>, vector<1x256xi32>
    %c0_2 = arith.constant 0 : index
    %c0_3 = arith.constant 0 : index
    %4 = vector.load %arg5[%c0_2, %c0_3] : memref<256x1xi32, #tpu.memory_space<vmem>>, vector<256x1xi32>
    %5 = tpu.iota {dimensions = array<i32: 0>} : vector<16x256xi32>
    %6 = vector.broadcast %3 : vector<1x256xi32> to vector<16x256xi32>
    %7 = arith.cmpi eq, %5, %6 : vector<16x256xi32>
    %8 = arith.extui %7 : vector<16x256xi1> to vector<16x256xi32>
    %9 = arith.sitofp %8 : vector<16x256xi32> to vector<16x256xf32>
    %10 = tpu.iota {dimensions = array<i32: 1>} : vector<256x16xi32>
    %11 = vector.broadcast %4 : vector<256x1xi32> to vector<256x16xi32>
    %12 = arith.cmpi eq, %10, %11 : vector<256x16xi32>
    %13 = arith.extui %12 : vector<256x16xi1> to vector<256x16xi32>
    %14 = arith.sitofp %13 : vector<256x16xi32> to vector<256x16xf32>
    %c0_4 = arith.constant 0 : index
    %c0_5 = arith.constant 0 : index
    %15 = vector.load %arg7[%c0_4, %c0_5] : memref<16x128xf32, #tpu.memory_space<vmem>>, vector<16x128xf32>
    %cst = arith.constant dense<0.000000e+00> : vector<256x128xf32>
    %16 = tpu.matmul %14, %15, %cst {dimension_numbers = #tpu.dot_dimension_numbers<[1], [0], [0], [1], [0, 0, 1, 1], [], []>} : vector<256x16xf32>, vector<16x128xf32>, vector<256x128xf32> -> vector<256x128xf32>
    %c0_6 = arith.constant 0 : index
    %c0_7 = arith.constant 0 : index
    %17 = vector.load %arg8[%c0_6, %c0_7] : memref<16x128xf32, #tpu.memory_space<vmem>>, vector<16x128xf32>
    %cst_8 = arith.constant dense<0.000000e+00> : vector<16x128xf32>
    %18 = tpu.matmul %9, %16, %cst_8 {dimension_numbers = #tpu.dot_dimension_numbers<[1], [0], [0], [1], [0, 0, 1, 1], [], []>} : vector<16x256xf32>, vector<256x128xf32>, vector<16x128xf32> -> vector<16x128xf32>
    %19 = arith.addf %17, %18 : vector<16x128xf32>
    %c0_9 = arith.constant 0 : index
    %c0_10 = arith.constant 0 : index
    %20 = vector.load %arg8[%c0_9, %c0_10] : memref<16x128xf32, #tpu.memory_space<vmem>>, vector<16x128xf32>
    tpu.vector_store %arg8[%c0_9, %c0_10], %19 {strides = array<i32>} : memref<16x128xf32, #tpu.memory_space<vmem>>, vector<16x128xf32>,
    %c0_i32_11 = arith.constant 0 : i32
    %21 = arith.cmpi eq, %arg0, %c0_i32_11 : i32
    %22 = arith.extui %21 : i1 to i32
    %c0_i32_12 = arith.constant 0 : i32
    %23 = arith.cmpi ne, %22, %c0_i32_12 : i32
    scf.if %23 {
      %c0_13 = arith.constant 0 : index
      %c0_14 = arith.constant 0 : index
      %24 = vector.load %arg7[%c0_13, %c0_14] : memref<16x128xf32, #tpu.memory_space<vmem>>, vector<16x128xf32>
      %25 = tpu.iota {dimensions = array<i32: 1>} : vector<16x128xi32>
      %c4_i32 = arith.constant 4 : i32
      %26 = vector.broadcast %c4_i32 : i32 to vector<16x128xi32>
      %27 = arith.cmpi slt, %25, %26 : vector<16x128xi32>
      %c0_15 = arith.constant 0 : index
      %c0_16 = arith.constant 0 : index
      %28 = vector.load %arg8[%c0_15, %c0_16] : memref<16x128xf32, #tpu.memory_space<vmem>>, vector<16x128xf32>
      %29 = arith.select %27, %28, %24 : vector<16x128xi1>, vector<16x128xf32>
      %c0_17 = arith.constant 0 : index
      %c0_18 = arith.constant 0 : index
      %30 = vector.load %arg3[%c0_17, %c0_18] : memref<1x128xf32, #tpu.memory_space<vmem>>, vector<1x128xf32>
      %31 = vector.broadcast %30 : vector<1x128xf32> to vector<16x128xf32>
      %32 = arith.addf %29, %31 : vector<16x128xf32>
      %cst_19 = arith.constant 0.000000e+00 : f32
      %33 = vector.broadcast %cst_19 : f32 to vector<16x128xf32>
      %34 = arith.maximumf %32, %33 : vector<16x128xf32>
      %cst_20 = arith.constant dense<0.000000e+00> : vector<128xf32>
      %35 = vector.multi_reduction <add>, %34, %cst_20 [0] : vector<16x128xf32> to vector<128xf32>
      %36 = vector.shape_cast %35 : vector<128xf32> to vector<1x128xf32>
      %cst_21 = arith.constant 1.600000e+01 : f32
      %37 = vector.broadcast %cst_21 : f32 to vector<1x128xf32>
      %38 = arith.divf %36, %37 : vector<1x128xf32>
      %c0_22 = arith.constant 0 : index
      %c0_23 = arith.constant 0 : index
      %39 = vector.load %arg6[%c0_22, %c0_23] : memref<1x128xf32, #tpu.memory_space<vmem>>, vector<1x128xf32>
      tpu.vector_store %arg6[%c0_22, %c0_23], %38 {strides = array<i32>} : memref<1x128xf32, #tpu.memory_space<vmem>>, vector<1x128xf32>,
    } else {
    }
    return
  }
  func.func @transform_0(%arg0: i32) -> (i32, i32) {
    %c0_i32 = arith.constant 0 : i32
    %c0_i32_0 = arith.constant 0 : i32
    %c0_i32_1 = arith.constant 0 : i32
    return %c0_i32, %c0_i32_0 : i32, i32
  }
  func.func @transform_1(%arg0: i32) -> (i32, i32) {
    %c0_i32 = arith.constant 0 : i32
    %c0_i32_0 = arith.constant 0 : i32
    %c0_i32_1 = arith.constant 0 : i32
    return %c0_i32, %c0_i32_0 : i32, i32
  }
  func.func @transform_2(%arg0: i32) -> (i32, i32) {
    %c0_i32 = arith.constant 0 : i32
    %c0_i32_0 = arith.constant 0 : i32
    %c0_i32_1 = arith.constant 0 : i32
    return %c0_i32, %c0_i32_0 : i32, i32
  }
  func.func @transform_3(%arg0: i32) -> (i32, i32) {
    %c0_i32 = arith.constant 0 : i32
    %c0_i32_0 = arith.constant 0 : i32
    return %c0_i32, %arg0 : i32, i32
  }
  func.func @transform_4(%arg0: i32) -> (i32, i32) {
    %c0_i32 = arith.constant 0 : i32
    %c0_i32_0 = arith.constant 0 : i32
    return %arg0, %c0_i32 : i32, i32
  }
  func.func @transform_5(%arg0: i32) -> (i32, i32) {
    %c0_i32 = arith.constant 0 : i32
    %c0_i32_0 = arith.constant 0 : i32
    %c0_i32_1 = arith.constant 0 : i32
    return %c0_i32, %c0_i32_0 : i32, i32
  }
}

</mosaic_0001>

<llo_original>
// kernel: gcnmax_edge_forward.1
$region0: #{gcnmax_edge_forward.1}
  #allocation0 [shape = 'u32[]', space=smem, size = 0x4, offset = 0x4, fixed_abs, tag = 'smem constant byte address 0x4 - core index']
  #allocation1 [shape = 'u32[144,128]{1,0:T(1,128)}', space=vmem, size = 0x12000, scoped, tag = 'internal scratch']
  #allocation2 [shape = 'f32[16,128]{1,0:T(8,128)}', space=vmem, size = 0x2000, scoped, tag = 'scratch operand']
  #allocation3 [shape = 'f32[16,128]{1,0:T(8,128)}', space=vmem, size = 0x2000, scoped, tag = 'scratch operand']
  %s0 = inlined_call_operand.vmem [shape: f32[16,32], index: 0, kind: input, shape index: {}]
  %s1 = inlined_call_operand.vmem [shape: f32[32,128], index: 1, kind: input, shape index: {}]
  %s2 = inlined_call_operand.vmem [shape: f32[1,128], index: 2, kind: input, shape index: {}]
  %s3 = inlined_call_operand.vmem [shape: s32[1,256], index: 3, kind: input, shape index: {}]
  %s4 = inlined_call_operand.vmem [shape: s32[256,1], index: 4, kind: input, shape index: {}]
  %s5 = inlined_call_operand.vmem [shape: f32[1,128], index: 5, kind: output, shape index: {}]
  %s6 = sld [smem:[#allocation0]]
  $region38: #{gcnmax_edge_forward.1} parent=0
    _
  %s8 = ssub.s32 1, %s6
  %s9 = scalar_select 0, %s8, %s6
  // Predicated region
  $region2: #{gcnmax_edge_forward.1} parent=0 // pred_check
    _
  $region3: #{gcnmax_edge_forward.1} parent=0 // pred_check_branch
    %11 = sbr.rel (0) target = $region5
  $region4: #{gcnmax_edge_forward.1} parent=0 // pred_region
    _
  $region5: #{gcnmax_edge_forward.1} parent=0 // pred_fallthru
    _
  // Predicated region
  $region6: #{gcnmax_edge_forward.1} parent=0 // pred_check
    _
  $region7: #{gcnmax_edge_forward.1} parent=0 // pred_check_branch
    %13 = sbr.rel (0) target = $region9
  $region8: #{gcnmax_edge_forward.1} parent=0 // pred_region
    _
  $region9: #{gcnmax_edge_forward.1} parent=0 // pred_fallthru
    _
  // Predicated region
  $region10: #{gcnmax_edge_forward.1} parent=0 // pred_check
    _
  $region11: #{gcnmax_edge_forward.1} parent=0 // pred_check_branch
    %15 = sbr.rel (0) target = $region13
  $region12: #{gcnmax_edge_forward.1} parent=0 // pred_region
    _
  $region13: #{gcnmax_edge_forward.1} parent=0 // pred_fallthru
    _
  // Predicated region
  $region14: #{gcnmax_edge_forward.1} parent=0 // pred_check
    _
  $region15: #{gcnmax_edge_forward.1} parent=0 // pred_check_branch
    %17 = sbr.rel (0) target = $region17
  $region16: #{gcnmax_edge_forward.1} parent=0 // pred_region
    _
  $region17: #{gcnmax_edge_forward.1} parent=0 // pred_fallthru
    _
  // Predicated region
  $region18: #{gcnmax_edge_forward.1} parent=0 // pred_check
    _
  $region19: #{gcnmax_edge_forward.1} parent=0 // pred_check_branch
    %19 = sbr.rel (0) target = $region21
  $region20: #{gcnmax_edge_forward.1} parent=0 // pred_region
    _
  $region21: #{gcnmax_edge_forward.1} parent=0 // pred_fallthru
    _
  %p20 = scmp.eq.s32.totalorder 0, 0
  // Predicated region
  $region22: #{gcnmax_edge_forward.1} parent=0 // pred_check
    %p21 = pneg %p20
  $region23: #{gcnmax_edge_forward.1} parent=0 // pred_check_branch
    %23 = sbr.rel (%p21) target = $region25
  $region24: #{gcnmax_edge_forward.1} parent=0 // pred_region
    %v24 = vld [vmem:[%s0] sm:$0xff]
    %v25 = vld [vmem:[%s0 + $0x8] sm:$0xff]
    %v26 = vld [vmem:[%s1] sm:$0xff]
    %v27 = vld [vmem:[%s1 + $0x8] sm:$0xff]
    %v28 = vld [vmem:[%s1 + $0x10] sm:$0xff]
    %v29 = vld [vmem:[%s1 + $0x18] sm:$0xff]
    %vm30 = vcmask 261120
    %v32 = vsel %vm30, %v24, 0
    %v35 = vsel %vm30, %v25, 0
    %37 = vmatprep.subr.mxu0 0.0
    %38 = vmatpush1.msra.mxu0 0.0
    %39 = vmatprep.subr.mxu0 0.0
    %40 = vmatpush1.msra.mxu0 0.0
    %41 = vmatprep.subr.mxu0 0.0
    %42 = vmatpush1.msra.mxu0 0.0
    %43 = vmatprep.subr.mxu0 0.0
    %44 = vmatpush1.msra.mxu0 0.0
    %45 = vmatprep.subr.mxu0 0.0
    %46 = vmatpush1.msra.mxu0 0.0
    %47 = vmatprep.subr.mxu0 0.0
    %48 = vmatpush1.msra.mxu0 0.0
    %49 = vmatprep.subr.mxu0 0.0
    %50 = vmatpush1.msra.mxu0 0.0
    %51 = vmatprep.subr.mxu0 0.0
    %52 = vmatpush1.msra.mxu0 0.0
    %53 = vmatprep.subr.mxu0 0.0
    %54 = vmatpush1.msra.mxu0 0.0
    %55 = vmatprep.subr.mxu0 0.0
    %56 = vmatpush1.msra.mxu0 0.0
    %57 = vmatprep.subr.mxu0 0.0
    %58 = vmatpush1.msra.mxu0 0.0
    %59 = vmatprep.subr.mxu0 0.0
    %60 = vmatpush1.msra.mxu0 0.0
    %61 = vmatprep.subr.mxu0 0.0
    %62 = vmatpush1.msra.mxu0 %v29
    %63 = vmatprep.subr.mxu0 0.0
    %64 = vmatpush1.msra.mxu0 %v28
    %65 = vmatprep.subr.mxu0 0.0
    %66 = vmatpush1.msra.mxu0 %v27
    %67 = vmatprep.subr.mxu0 0.0
    %68 = vmatpush1.msra.mxu0 %v26
    %69 = vmatprep.subr.mxu0 0.0
    %70 = vmatpush2.msra.mxu0 0.0
    %71 = vmatprep.subr.mxu0 0.0
    %72 = vmatpush2.msra.mxu0 0.0
    %73 = vmatprep.subr.mxu0 0.0
    %74 = vmatpush2.msra.mxu0 0.0
    %75 = vmatprep.subr.mxu0 0.0
    %76 = vmatpush2.msra.mxu0 0.0
    %77 = vmatprep.subr.mxu0 0.0
    %78 = vmatpush2.msra.mxu0 0.0
    %79 = vmatprep.subr.mxu0 0.0
    %80 = vmatpush2.msra.mxu0 0.0
    %81 = vmatprep.subr.mxu0 0.0
    %82 = vmatpush2.msra.mxu0 0.0
    %83 = vmatprep.subr.mxu0 0.0
    %84 = vmatpush2.msra.mxu0 0.0
    %85 = vmatprep.subr.mxu0 0.0
    %86 = vmatpush2.msra.mxu0 0.0
    %87 = vmatprep.subr.mxu0 0.0
    %88 = vmatpush2.msra.mxu0 0.0
    %89 = vmatprep.subr.mxu0 0.0
    %90 = vmatpush2.msra.mxu0 0.0
    %91 = vmatprep.subr.mxu0 0.0
    %92 = vmatpush2.msra.mxu0 0.0
    %93 = vmatprep.subr.mxu0 0.0
    %94 = vmatpush2.msra.mxu0 0.0
    %95 = vmatprep.subr.mxu0 0.0
    %96 = vmatpush2.msra.mxu0 0.0
    %97 = vmatprep.subr.mxu0 0.0
    %98 = vmatpush2.msra.mxu0 0.0
    %99 = vmatprep.subr.mxu0 0.0
    %100 = vmatpush2.msra.mxu0 0.0
    %101 = vmatprep.mubr.f32.mxu0 0.0
    %102 = vmatmul.mubr.f32.gmra.mxu0 %v32
    %v103 = vpop.f32.mrf.mxu0
    %v104 = vadd.f32 0.0, %v103
    %v105 = vpop.f32.mrf.mxu0
    %106 = vmatprep.mubr.f32.mxu0 0.0
    %107 = vmatmul.mubr.f32.gmra.mxu0 %v35
    %v108 = vpop.f32.mrf.mxu0
    %v109 = vadd.f32 0.0, %v108
    %v110 = vpop.f32.mrf.mxu0
    %111 = vdwg.mxu0
    %112 = vst [vmem:[#allocation2] sm:$0xff] %v104
    %113 = vst [vmem:[#allocation2 + $0x8] sm:$0xff] %v109
    %114 = vst [vmem:[#allocation3] sm:$0xff] 0.0
    %115 = vst [vmem:[#allocation3 + $0x8] sm:$0xff] 0.0
  $region25: #{gcnmax_edge_forward.1} parent=0 // pred_fallthru
    _
  %v116 = vld [vmem:[%s3] sm:$0x3]
  %v117 = vld [vmem:[%s4] sm:$0xff]
  %v118 = vld [vmem:[%s4 + $0x8] sm:$0xff]
  %v119 = vld [vmem:[%s4 + $0x10] sm:$0xff]
  %v120 = vld [vmem:[%s4 + $0x18] sm:$0xff]
  %v121 = vld [vmem:[%s4 + $0x20] sm:$0xff]
  %v122 = vld [vmem:[%s4 + $0x28] sm:$0xff]
  %v123 = vld [vmem:[%s4 + $0x30] sm:$0xff]
  %v124 = vld [vmem:[%s4 + $0x38] sm:$0xff]
  %v125 = vld [vmem:[%s4 + $0x40] sm:$0xff]
  %v126 = vld [vmem:[%s4 + $0x48] sm:$0xff]
  %v127 = vld [vmem:[%s4 + $0x50] sm:$0xff]
  %v128 = vld [vmem:[%s4 + $0x58] sm:$0xff]
  %v129 = vld [vmem:[%s4 + $0x60] sm:$0xff]
  %v130 = vld [vmem:[%s4 + $0x68] sm:$0xff]
  %v131 = vld [vmem:[%s4 + $0x70] sm:$0xff]
  %v132 = vld [vmem:[%s4 + $0x78] sm:$0xff]
  %v133 = vld [vmem:[%s4 + $0x80] sm:$0xff]
  %v134 = vld [vmem:[%s4 + $0x88] sm:$0xff]
  %v135 = vld [vmem:[%s4 + $0x90] sm:$0xff]
  %v136 = vld [vmem:[%s4 + $0x98] sm:$0xff]
  %v137 = vld [vmem:[%s4 + $0xa0] sm:$0xff]
  %v138 = vld [vmem:[%s4 + $0xa8] sm:$0xff]
  %v139 = vld [vmem:[%s4 + $0xb0] sm:$0xff]
  %v140 = vld [vmem:[%s4 + $0xb8] sm:$0xff]
  %v141 = vld [vmem:[%s4 + $0xc0] sm:$0xff]
  %v142 = vld [vmem:[%s4 + $0xc8] sm:$0xff]
  %v143 = vld [vmem:[%s4 + $0xd0] sm:$0xff]
  %v144 = vld [vmem:[%s4 + $0xd8] sm:$0xff]
  %v145 = vld [vmem:[%s4 + $0xe0] sm:$0xff]
  %v146 = vld [vmem:[%s4 + $0xe8] sm:$0xff]
  %v147 = vld [vmem:[%s4 + $0xf0] sm:$0xff]
  %v148 = vld [vmem:[%s4 + $0xf8] sm:$0xff]
  %v149 = vlaneseq
  %v150 = vshrl.u32 %v149, 7
  %v151 = vadd.s32 %v150, 8
  %v152 = vlaneseq
  %v153 = vshrl.u32 %v152, 7
  %v154 = vsub.s32 0, %v153
  %v155 = vrot.slane %v116, %v154
  %v156 = vlaneseq
  %v157 = vshrl.u32 %v156, 7
  %v158 = vsub.s32 1, %v157
  %v159 = vrot.slane %v116, %v158
  %vm160 = vcmp.eq.s32.totalorder %v150, %v155
  %vm161 = vcmp.eq.s32.totalorder %v150, %v159
  %vm162 = vcmp.eq.s32.totalorder %v151, %v155
  %vm163 = vcmp.eq.s32.totalorder %v151, %v159
  %v164 = vsel %vm160, 1, 0
  %v165 = vsel %vm161, 1, 0
  %v166 = vsel %vm162, 1, 0
  %v167 = vsel %vm163, 1, 0
  %v168 = vcvt.s32.f32 %v164
  %v169 = vcvt.s32.f32 %v165
  %v170 = vcvt.s32.f32 %v166
  %v171 = vcvt.s32.f32 %v167
  %v172 = vlaneseq
  %v173 = vand.u32 %v172, 127
  %174 = vset.pattern.permute.xlu0 0
  %175 = vperm.xlu0 %174, %v117
  %v176 = vpop.permute.xlu0 %175
  %177 = vset.pattern.permute.xlu0 0
  %178 = vperm.xlu0 %177, %v118
  %v179 = vpop.permute.xlu0 %178
  %180 = vset.pattern.permute.xlu0 0
  %181 = vperm.xlu0 %180, %v119
  %v182 = vpop.permute.xlu0 %181
  %183 = vset.pattern.permute.xlu0 0
  %184 = vperm.xlu0 %183, %v120
  %v185 = vpop.permute.xlu0 %184
  %186 = vset.pattern.permute.xlu0 0
  %187 = vperm.xlu0 %186, %v121
  %v188 = vpop.permute.xlu0 %187
  %189 = vset.pattern.permute.xlu0 0
  %190 = vperm.xlu0 %189, %v122
  %v191 = vpop.permute.xlu0 %190
  %192 = vset.pattern.permute.xlu0 0
  %193 = vperm.xlu0 %192, %v123
  %v194 = vpop.permute.xlu0 %193
  %195 = vset.pattern.permute.xlu0 0
  %196 = vperm.xlu0 %195, %v124
  %v197 = vpop.permute.xlu0 %196
  %198 = vset.pattern.permute.xlu0 0
  %199 = vperm.xlu0 %198, %v125
  %v200 = vpop.permute.xlu0 %199
  %201 = vset.pattern.permute.xlu0 0
  %202 = vperm.xlu0 %201, %v126
  %v203 = vpop.permute.xlu0 %202
  %204 = vset.pattern.permute.xlu0 0
  %205 = vperm.xlu0 %204, %v127
  %v206 = vpop.permute.xlu0 %205
  %207 = vset.pattern.permute.xlu0 0
  %208 = vperm.xlu0 %207, %v128
  %v209 = vpop.permute.xlu0 %208
  %210 = vset.pattern.permute.xlu0 0
  %211 = vperm.xlu0 %210, %v129
  %v212 = vpop.permute.xlu0 %211
  %213 = vset.pattern.permute.xlu0 0
  %214 = vperm.xlu0 %213, %v130
  %v215 = vpop.permute.xlu0 %214
  %216 = vset.pattern.permute.xlu0 0
  %217 = vperm.xlu0 %216, %v131
  %v218 = vpop.permute.xlu0 %217
  %219 = vset.pattern.permute.xlu0 0
  %220 = vperm.xlu0 %219, %v132
  %v221 = vpop.permute.xlu0 %220
  %222 = vset.pattern.permute.xlu0 0
  %223 = vperm.xlu0 %222, %v133
  %v224 = vpop.permute.xlu0 %223
  %225 = vset.pattern.permute.xlu0 0
  %226 = vperm.xlu0 %225, %v134
  %v227 = vpop.permute.xlu0 %226
  %228 = vset.pattern.permute.xlu0 0
  %229 = vperm.xlu0 %228, %v135
  %v230 = vpop.permute.xlu0 %229
  %231 = vset.pattern.permute.xlu0 0
  %232 = vperm.xlu0 %231, %v136
  %v233 = vpop.permute.xlu0 %232
  %234 = vset.pattern.permute.xlu0 0
  %235 = vperm.xlu0 %234, %v137
  %v236 = vpop.permute.xlu0 %235
  %237 = vset.pattern.permute.xlu0 0
  %238 = vperm.xlu0 %237, %v138
  %v239 = vpop.permute.xlu0 %238
  %240 = vset.pattern.permute.xlu0 0
  %241 = vperm.xlu0 %240, %v139
  %v242 = vpop.permute.xlu0 %241
  %243 = vset.pattern.permute.xlu0 0
  %244 = vperm.xlu0 %243, %v140
  %v245 = vpop.permute.xlu0 %244
  %246 = vset.pattern.permute.xlu0 0
  %247 = vperm.xlu0 %246, %v141
  %v248 = vpop.permute.xlu0 %247
  %249 = vset.pattern.permute.xlu0 0
  %250 = vperm.xlu0 %249, %v142
  %v251 = vpop.permute.xlu0 %250
  %252 = vset.pattern.permute.xlu0 0
  %253 = vperm.xlu0 %252, %v143
  %v254 = vpop.permute.xlu0 %253
  %255 = vset.pattern.permute.xlu0 0
  %256 = vperm.xlu0 %255, %v144
  %v257 = vpop.permute.xlu0 %256
  %258 = vset.pattern.permute.xlu0 0
  %259 = vperm.xlu0 %258, %v145
  %v260 = vpop.permute.xlu0 %259
  %261 = vset.pattern.permute.xlu0 0
  %262 = vperm.xlu0 %261, %v146
  %v263 = vpop.permute.xlu0 %262
  %264 = vset.pattern.permute.xlu0 0
  %265 = vperm.xlu0 %264, %v147
  %v266 = vpop.permute.xlu0 %265
  %267 = vset.pattern.permute.xlu0 0
  %268 = vperm.xlu0 %267, %v148
  %v269 = vpop.permute.xlu0 %268
  %vm270 = vcmp.eq.s32.totalorder %v173, %v176
  %vm271 = vcmp.eq.s32.totalorder %v173, %v179
  %vm272 = vcmp.eq.s32.totalorder %v173, %v182
  %vm273 = vcmp.eq.s32.totalorder %v173, %v185
  %vm274 = vcmp.eq.s32.totalorder %v173, %v188
  %vm275 = vcmp.eq.s32.totalorder %v173, %v191
  %vm276 = vcmp.eq.s32.totalorder %v173, %v194
  %vm277 = vcmp.eq.s32.totalorder %v173, %v197
  %vm278 = vcmp.eq.s32.totalorder %v173, %v200
  %vm279 = vcmp.eq.s32.totalorder %v173, %v203
  %vm280 = vcmp.eq.s32.totalorder %v173, %v206
  %vm281 = vcmp.eq.s32.totalorder %v173, %v209
  %vm282 = vcmp.eq.s32.totalorder %v173, %v212
  %vm283 = vcmp.eq.s32.totalorder %v173, %v215
  %vm284 = vcmp.eq.s32.totalorder %v173, %v218
  %vm285 = vcmp.eq.s32.totalorder %v173, %v221
  %vm286 = vcmp.eq.s32.totalorder %v173, %v224
  %vm287 = vcmp.eq.s32.totalorder %v173, %v227
  %vm288 = vcmp.eq.s32.totalorder %v173, %v230
  %vm289 = vcmp.eq.s32.totalorder %v173, %v233
  %vm290 = vcmp.eq.s32.totalorder %v173, %v236
  %vm291 = vcmp.eq.s32.totalorder %v173, %v239
  %vm292 = vcmp.eq.s32.totalorder %v173, %v242
  %vm293 = vcmp.eq.s32.totalorder %v173, %v245
  %vm294 = vcmp.eq.s32.totalorder %v173, %v248
  %vm295 = vcmp.eq.s32.totalorder %v173, %v251
  %vm296 = vcmp.eq.s32.totalorder %v173, %v254
  %vm297 = vcmp.eq.s32.totalorder %v173, %v257
  %vm298 = vcmp.eq.s32.totalorder %v173, %v260
  %vm299 = vcmp.eq.s32.totalorder %v173, %v263
  %vm300 = vcmp.eq.s32.totalorder %v173, %v266
  %vm301 = vcmp.eq.s32.totalorder %v173, %v269
  %v302 = vsel %vm270, 1, 0
  %v303 = vsel %vm271, 1, 0
  %v304 = vsel %vm272, 1, 0
  %v305 = vsel %vm273, 1, 0
  %v306 = vsel %vm274, 1, 0
  %v307 = vsel %vm275, 1, 0
  %v308 = vsel %vm276, 1, 0
  %v309 = vsel %vm277, 1, 0
  %v310 = vsel %vm278, 1, 0
  %v311 = vsel %vm279, 1, 0
  %v312 = vsel %vm280, 1, 0
  %v313 = vsel %vm281, 1, 0
  %v314 = vsel %vm282, 1, 0
  %v315 = vsel %vm283, 1, 0
  %v316 = vsel %vm284, 1, 0
  %v317 = vsel %vm285, 1, 0
  %v318 = vsel %vm286, 1, 0
  %v319 = vsel %vm287, 1, 0
  %v320 = vsel %vm288, 1, 0
  %v321 = vsel %vm289, 1, 0
  %v322 = vsel %vm290, 1, 0
  %v323 = vsel %vm291, 1, 0
  %v324 = vsel %vm292, 1, 0
  %v325 = vsel %vm293, 1, 0
  %v326 = vsel %vm294, 1, 0
  %v327 = vsel %vm295, 1, 0
  %v328 = vsel %vm296, 1, 0
  %v329 = vsel %vm297, 1, 0
  %v330 = vsel %vm298, 1, 0
  %v331 = vsel %vm299, 1, 0
  %v332 = vsel %vm300, 1, 0
  %v333 = vsel %vm301, 1, 0
  %v334 = vcvt.s32.f32 %v302
  %v335 = vcvt.s32.f32 %v303
  %v336 = vcvt.s32.f32 %v304
  %v337 = vcvt.s32.f32 %v305
  %v338 = vcvt.s32.f32 %v306
  %v339 = vcvt.s32.f32 %v307
  %v340 = vcvt.s32.f32 %v308
  %v341 = vcvt.s32.f32 %v309
  %v342 = vcvt.s32.f32 %v310
  %v343 = vcvt.s32.f32 %v311
  %v344 = vcvt.s32.f32 %v312
  %v345 = vcvt.s32.f32 %v313
  %v346 = vcvt.s32.f32 %v314
  %v347 = vcvt.s32.f32 %v315
  %v348 = vcvt.s32.f32 %v316
  %v349 = vcvt.s32.f32 %v317
  %v350 = vcvt.s32.f32 %v318
  %v351 = vcvt.s32.f32 %v319
  %v352 = vcvt.s32.f32 %v320
  %v353 = vcvt.s32.f32 %v321
  %v354 = vcvt.s32.f32 %v322
  %v355 = vcvt.s32.f32 %v323
  %v356 = vcvt.s32.f32 %v324
  %v357 = vcvt.s32.f32 %v325
  %v358 = vcvt.s32.f32 %v326
  %v359 = vcvt.s32.f32 %v327
  %v360 = vcvt.s32.f32 %v328
  %v361 = vcvt.s32.f32 %v329
  %v362 = vcvt.s32.f32 %v330
  %v363 = vcvt.s32.f32 %v331
  %v364 = vcvt.s32.f32 %v332
  %v365 = vcvt.s32.f32 %v333
  %v366 = vld [vmem:[#allocation2] sm:$0xff]
  %v367 = vld [vmem:[#allocation2 + $0x8] sm:$0xff]
  %vm368 = vcmask 130048
  %v370 = vsel %vm368, %v334, 0
  %v373 = vsel %vm368, %v335, 0
  %v376 = vsel %vm368, %v336, 0
  %v379 = vsel %vm368, %v337, 0
  %v382 = vsel %vm368, %v338, 0
  %v385 = vsel %vm368, %v339, 0
  %v388 = vsel %vm368, %v340, 0
  %v391 = vsel %vm368, %v341, 0
  %v394 = vsel %vm368, %v342, 0
  %v397 = vsel %vm368, %v343, 0
  %v400 = vsel %vm368, %v344, 0
  %v403 = vsel %vm368, %v345, 0
  %v406 = vsel %vm368, %v346, 0
  %v409 = vsel %vm368, %v347, 0
  %v412 = vsel %vm368, %v348, 0
  %v415 = vsel %vm368, %v349, 0
  %v418 = vsel %vm368, %v350, 0
  %v421 = vsel %vm368, %v351, 0
  %v424 = vsel %vm368, %v352, 0
  %v427 = vsel %vm368, %v353, 0
  %v430 = vsel %vm368, %v354, 0
  %v433 = vsel %vm368, %v355, 0
  %v436 = vsel %vm368, %v356, 0
  %v439 = vsel %vm368, %v357, 0
  %v442 = vsel %vm368, %v358, 0
  %v445 = vsel %vm368, %v359, 0
  %v448 = vsel %vm368, %v360, 0
  %v451 = vsel %vm368, %v361, 0
  %v454 = vsel %vm368, %v362, 0
  %v457 = vsel %vm368, %v363, 0
  %v460 = vsel %vm368, %v364, 0
  %v463 = vsel %vm368, %v365, 0
  %465 = vmatprep.subr.mxu0 0.0
  %466 = vmatpush1.msra.mxu0 0.0
  %467 = vmatprep.subr.mxu0 0.0
  %468 = vmatpush1.msra.mxu0 0.0
  %469 = vmatprep.subr.mxu0 0.0
  %470 = vmatpush1.msra.mxu0 0.0
  %471 = vmatprep.subr.mxu0 0.0
  %472 = vmatpush1.msra.mxu0 0.0
  %473 = vmatprep.subr.mxu0 0.0
  %474 = vmatpush1.msra.mxu0 0.0
  %475 = vmatprep.subr.mxu0 0.0
  %476 = vmatpush1.msra.mxu0 0.0
  %477 = vmatprep.subr.mxu0 0.0
  %478 = vmatpush1.msra.mxu0 0.0
  %479 = vmatprep.subr.mxu0 0.0
  %480 = vmatpush1.msra.mxu0 0.0
  %481 = vmatprep.subr.mxu0 0.0
  %482 = vmatpush1.msra.mxu0 0.0
  %483 = vmatprep.subr.mxu0 0.0
  %484 = vmatpush1.msra.mxu0 0.0
  %485 = vmatprep.subr.mxu0 0.0
  %486 = vmatpush1.msra.mxu0 0.0
  %487 = vmatprep.subr.mxu0 0.0
  %488 = vmatpush1.msra.mxu0 0.0
  %489 = vmatprep.subr.mxu0 0.0
  %490 = vmatpush1.msra.mxu0 0.0
  %491 = vmatprep.subr.mxu0 0.0
  %492 = vmatpush1.msra.mxu0 0.0
  %493 = vmatprep.subr.mxu0 0.0
  %494 = vmatpush1.msra.mxu0 %v367
  %495 = vmatprep.subr.mxu0 0.0
  %496 = vmatpush1.msra.mxu0 %v366
  %497 = vmatprep.subr.mxu0 0.0
  %498 = vmatpush2.msra.mxu0 0.0
  %499 = vmatprep.subr.mxu0 0.0
  %500 = vmatpush2.msra.mxu0 0.0
  %501 = vmatprep.subr.mxu0 0.0
  %502 = vmatpush2.msra.mxu0 0.0
  %503 = vmatprep.subr.mxu0 0.0
  %504 = vmatpush2.msra.mxu0 0.0
  %505 = vmatprep.subr.mxu0 0.0
  %506 = vmatpush2.msra.mxu0 0.0
  %507 = vmatprep.subr.mxu0 0.0
  %508 = vmatpush2.msra.mxu0 0.0
  %509 = vmatprep.subr.mxu0 0.0
  %510 = vmatpush2.msra.mxu0 0.0
  %511 = vmatprep.subr.mxu0 0.0
  %512 = vmatpush2.msra.mxu0 0.0
  %513 = vmatprep.subr.mxu0 0.0
  %514 = vmatpush2.msra.mxu0 0.0
  %515 = vmatprep.subr.mxu0 0.0
  %516 = vmatpush2.msra.mxu0 0.0
  %517 = vmatprep.subr.mxu0 0.0
  %518 = vmatpush2.msra.mxu0 0.0
  %519 = vmatprep.subr.mxu0 0.0
  %520 = vmatpush2.msra.mxu0 0.0
  %521 = vmatprep.subr.mxu0 0.0
  %522 = vmatpush2.msra.mxu0 0.0
  %523 = vmatprep.subr.mxu0 0.0
  %524 = vmatpush2.msra.mxu0 0.0
  %525 = vmatprep.subr.mxu0 0.0
  %526 = vmatpush2.msra.mxu0 0.0
  %527 = vmatprep.subr.mxu0 0.0
  %528 = vmatpush2.msra.mxu0 0.0
  %529 = vmatprep.mubr.f32.mxu0 0.0
  %530 = vmatmul.mubr.f32.gmra.mxu0 %v370
  %v531 = vpop.f32.mrf.mxu0
  %v532 = vadd.f32 0.0, %v531
  %v533 = vpop.f32.mrf.mxu0
  %534 = vmatprep.mubr.f32.mxu0 0.0
  %535 = vmatmul.mubr.f32.gmra.mxu0 %v373
  %v536 = vpop.f32.mrf.mxu0
  %v537 = vadd.f32 0.0, %v536
  %v538 = vpop.f32.mrf.mxu0
  %539 = vmatprep.mubr.f32.mxu0 0.0
  %540 = vmatmul.mubr.f32.gmra.mxu0 %v376
  %v541 = vpop.f32.mrf.mxu0
  %v542 = vadd.f32 0.0, %v541
  %v543 = vpop.f32.mrf.mxu0
  %544 = vmatprep.mubr.f32.mxu0 0.0
  %545 = vmatmul.mubr.f32.gmra.mxu0 %v379
  %v546 = vpop.f32.mrf.mxu0
  %v547 = vadd.f32 0.0, %v546
  %v548 = vpop.f32.mrf.mxu0
  %549 = vmatprep.mubr.f32.mxu0 0.0
  %550 = vmatmul.mubr.f32.gmra.mxu0 %v382
  %v551 = vpop.f32.mrf.mxu0
  %v552 = vadd.f32 0.0, %v551
  %v553 = vpop.f32.mrf.mxu0
  %554 = vmatprep.mubr.f32.mxu0 0.0
  %555 = vmatmul.mubr.f32.gmra.mxu0 %v385
  %v556 = vpop.f32.mrf.mxu0
  %v557 = vadd.f32 0.0, %v556
  %v558 = vpop.f32.mrf.mxu0
  %559 = vmatprep.mubr.f32.mxu0 0.0
  %560 = vmatmul.mubr.f32.gmra.mxu0 %v388
  %v561 = vpop.f32.mrf.mxu0
  %v562 = vadd.f32 0.0, %v561
  %v563 = vpop.f32.mrf.mxu0
  %564 = vmatprep.mubr.f32.mxu0 0.0
  %565 = vmatmul.mubr.f32.gmra.mxu0 %v391
  %v566 = vpop.f32.mrf.mxu0
  %v567 = vadd.f32 0.0, %v566
  %v568 = vpop.f32.mrf.mxu0
  %569 = vmatprep.mubr.f32.mxu0 0.0
  %570 = vmatmul.mubr.f32.gmra.mxu0 %v394
  %v571 = vpop.f32.mrf.mxu0
  %v572 = vadd.f32 0.0, %v571
  %v573 = vpop.f32.mrf.mxu0
  %574 = vmatprep.mubr.f32.mxu0 0.0
  %575 = vmatmul.mubr.f32.gmra.mxu0 %v397
  %v576 = vpop.f32.mrf.mxu0
  %v577 = vadd.f32 0.0, %v576
  %v578 = vpop.f32.mrf.mxu0
  %579 = vmatprep.mubr.f32.mxu0 0.0
  %580 = vmatmul.mubr.f32.gmra.mxu0 %v400
  %v581 = vpop.f32.mrf.mxu0
  %v582 = vadd.f32 0.0, %v581
  %v583 = vpop.f32.mrf.mxu0
  %584 = vmatprep.mubr.f32.mxu0 0.0
  %585 = vmatmul.mubr.f32.gmra.mxu0 %v403
  %v586 = vpop.f32.mrf.mxu0
  %v587 = vadd.f32 0.0, %v586
  %v588 = vpop.f32.mrf.mxu0
  %589 = vmatprep.mubr.f32.mxu0 0.0
  %590 = vmatmul.mubr.f32.gmra.mxu0 %v406
  %v591 = vpop.f32.mrf.mxu0
  %v592 = vadd.f32 0.0, %v591
  %v593 = vpop.f32.mrf.mxu0
  %594 = vmatprep.mubr.f32.mxu0 0.0
  %595 = vmatmul.mubr.f32.gmra.mxu0 %v409
  %v596 = vpop.f32.mrf.mxu0
  %v597 = vadd.f32 0.0, %v596
  %v598 = vpop.f32.mrf.mxu0
  %599 = vmatprep.mubr.f32.mxu0 0.0
  %600 = vmatmul.mubr.f32.gmra.mxu0 %v412
  %v601 = vpop.f32.mrf.mxu0
  %v602 = vadd.f32 0.0, %v601
  %v603 = vpop.f32.mrf.mxu0
  %604 = vmatprep.mubr.f32.mxu0 0.0
  %605 = vmatmul.mubr.f32.gmra.mxu0 %v415
  %v606 = vpop.f32.mrf.mxu0
  %v607 = vadd.f32 0.0, %v606
  %v608 = vpop.f32.mrf.mxu0
  %609 = vmatprep.mubr.f32.mxu0 0.0
  %610 = vmatmul.mubr.f32.gmra.mxu0 %v418
  %v611 = vpop.f32.mrf.mxu0
  %v612 = vadd.f32 0.0, %v611
  %v613 = vpop.f32.mrf.mxu0
  %614 = vmatprep.mubr.f32.mxu0 0.0
  %615 = vmatmul.mubr.f32.gmra.mxu0 %v421
  %v616 = vpop.f32.mrf.mxu0
  %v617 = vadd.f32 0.0, %v616
  %v618 = vpop.f32.mrf.mxu0
  %619 = vmatprep.mubr.f32.mxu0 0.0
  %620 = vmatmul.mubr.f32.gmra.mxu0 %v424
  %v621 = vpop.f32.mrf.mxu0
  %v622 = vadd.f32 0.0, %v621
  %v623 = vpop.f32.mrf.mxu0
  %624 = vmatprep.mubr.f32.mxu0 0.0
  %625 = vmatmul.mubr.f32.gmra.mxu0 %v427
  %v626 = vpop.f32.mrf.mxu0
  %v627 = vadd.f32 0.0, %v626
  %v628 = vpop.f32.mrf.mxu0
  %629 = vmatprep.mubr.f32.mxu0 0.0
  %630 = vmatmul.mubr.f32.gmra.mxu0 %v430
  %v631 = vpop.f32.mrf.mxu0
  %v632 = vadd.f32 0.0, %v631
  %v633 = vpop.f32.mrf.mxu0
  %634 = vmatprep.mubr.f32.mxu0 0.0
  %635 = vmatmul.mubr.f32.gmra.mxu0 %v433
  %v636 = vpop.f32.mrf.mxu0
  %v637 = vadd.f32 0.0, %v636
  %v638 = vpop.f32.mrf.mxu0
  %639 = vmatprep.mubr.f32.mxu0 0.0
  %640 = vmatmul.mubr.f32.gmra.mxu0 %v436
  %v641 = vpop.f32.mrf.mxu0
  %v642 = vadd.f32 0.0, %v641
  %v643 = vpop.f32.mrf.mxu0
  %644 = vmatprep.mubr.f32.mxu0 0.0
  %645 = vmatmul.mubr.f32.gmra.mxu0 %v439
  %v646 = vpop.f32.mrf.mxu0
  %v647 = vadd.f32 0.0, %v646
  %v648 = vpop.f32.mrf.mxu0
  %649 = vmatprep.mubr.f32.mxu0 0.0
  %650 = vmatmul.mubr.f32.gmra.mxu0 %v442
  %v651 = vpop.f32.mrf.mxu0
  %v652 = vadd.f32 0.0, %v651
  %v653 = vpop.f32.mrf.mxu0
  %654 = vmatprep.mubr.f32.mxu0 0.0
  %655 = vmatmul.mubr.f32.gmra.mxu0 %v445
  %v656 = vpop.f32.mrf.mxu0
  %v657 = vadd.f32 0.0, %v656
  %v658 = vpop.f32.mrf.mxu0
  %659 = vmatprep.mubr.f32.mxu0 0.0
  %660 = vmatmul.mubr.f32.gmra.mxu0 %v448
  %v661 = vpop.f32.mrf.mxu0
  %v662 = vadd.f32 0.0, %v661
  %v663 = vpop.f32.mrf.mxu0
  %664 = vmatprep.mubr.f32.mxu0 0.0
  %665 = vmatmul.mubr.f32.gmra.mxu0 %v451
  %v666 = vpop.f32.mrf.mxu0
  %v667 = vadd.f32 0.0, %v666
  %v668 = vpop.f32.mrf.mxu0
  %669 = vmatprep.mubr.f32.mxu0 0.0
  %670 = vmatmul.mubr.f32.gmra.mxu0 %v454
  %v671 = vpop.f32.mrf.mxu0
  %v672 = vadd.f32 0.0, %v671
  %v673 = vpop.f32.mrf.mxu0
  %674 = vmatprep.mubr.f32.mxu0 0.0
  %675 = vmatmul.mubr.f32.gmra.mxu0 %v457
  %v676 = vpop.f32.mrf.mxu0
  %v677 = vadd.f32 0.0, %v676
  %v678 = vpop.f32.mrf.mxu0
  %679 = vmatprep.mubr.f32.mxu0 0.0
  %680 = vmatmul.mubr.f32.gmra.mxu0 %v460
  %v681 = vpop.f32.mrf.mxu0
  %v682 = vadd.f32 0.0, %v681
  %v683 = vpop.f32.mrf.mxu0
  %684 = vmatprep.mubr.f32.mxu0 0.0
  %685 = vmatmul.mubr.f32.gmra.mxu0 %v463
  %v686 = vpop.f32.mrf.mxu0
  %v687 = vadd.f32 0.0, %v686
  %v688 = vpop.f32.mrf.mxu0
  %689 = vdwg.mxu0
  %v690 = vld [vmem:[#allocation3] sm:$0xff]
  %v691 = vld [vmem:[#allocation3 + $0x8] sm:$0xff]
  %692 = vmatprep.subr.mxu0 0.0
  %693 = vmatpush1.msra.mxu0 %v607
  %694 = vmatprep.subr.mxu0 0.0
  %695 = vmatpush1.msra.mxu0 %v602
  %696 = vmatprep.subr.mxu0 0.0
  %697 = vmatpush1.msra.mxu0 %v597
  %698 = vmatprep.subr.mxu0 0.0
  %699 = vmatpush1.msra.mxu0 %v592
  %700 = vmatprep.subr.mxu0 0.0
  %701 = vmatpush1.msra.mxu0 %v587
  %702 = vmatprep.subr.mxu0 0.0
  %703 = vmatpush1.msra.mxu0 %v582
  %704 = vmatprep.subr.mxu0 0.0
  %705 = vmatpush1.msra.mxu0 %v577
  %706 = vmatprep.subr.mxu0 0.0
  %707 = vmatpush1.msra.mxu0 %v572
  %708 = vmatprep.subr.mxu0 0.0
  %709 = vmatpush1.msra.mxu0 %v567
  %710 = vmatprep.subr.mxu0 0.0
  %711 = vmatpush1.msra.mxu0 %v562
  %712 = vmatprep.subr.mxu0 0.0
  %713 = vmatpush1.msra.mxu0 %v557
  %714 = vmatprep.subr.mxu0 0.0
  %715 = vmatpush1.msra.mxu0 %v552
  %716 = vmatprep.subr.mxu0 0.0
  %717 = vmatpush1.msra.mxu0 %v547
  %718 = vmatprep.subr.mxu0 0.0
  %719 = vmatpush1.msra.mxu0 %v542
  %720 = vmatprep.subr.mxu0 0.0
  %721 = vmatpush1.msra.mxu0 %v537
  %722 = vmatprep.subr.mxu0 0.0
  %723 = vmatpush1.msra.mxu0 %v532
  %724 = vmatprep.subr.mxu0 0.0
  %725 = vmatpush2.msra.mxu0 %v687
  %726 = vmatprep.subr.mxu0 0.0
  %727 = vmatpush2.msra.mxu0 %v682
  %728 = vmatprep.subr.mxu0 0.0
  %729 = vmatpush2.msra.mxu0 %v677
  %730 = vmatprep.subr.mxu0 0.0
  %731 = vmatpush2.msra.mxu0 %v672
  %732 = vmatprep.subr.mxu0 0.0
  %733 = vmatpush2.msra.mxu0 %v667
  %734 = vmatprep.subr.mxu0 0.0
  %735 = vmatpush2.msra.mxu0 %v662
  %736 = vmatprep.subr.mxu0 0.0
  %737 = vmatpush2.msra.mxu0 %v657
  %738 = vmatprep.subr.mxu0 0.0
  %739 = vmatpush2.msra.mxu0 %v652
  %740 = vmatprep.subr.mxu0 0.0
  %741 = vmatpush2.msra.mxu0 %v647
  %742 = vmatprep.subr.mxu0 0.0
  %743 = vmatpush2.msra.mxu0 %v642
  %744 = vmatprep.subr.mxu0 0.0
  %745 = vmatpush2.msra.mxu0 %v637
  %746 = vmatprep.subr.mxu0 0.0
  %747 = vmatpush2.msra.mxu0 %v632
  %748 = vmatprep.subr.mxu0 0.0
  %749 = vmatpush2.msra.mxu0 %v627
  %750 = vmatprep.subr.mxu0 0.0
  %751 = vmatpush2.msra.mxu0 %v622
  %752 = vmatprep.subr.mxu0 0.0
  %753 = vmatpush2.msra.mxu0 %v617
  %754 = vmatprep.subr.mxu0 0.0
  %755 = vmatpush2.msra.mxu0 %v612
  %756 = vmatprep.mubr.f32.mxu0 %v169
  %757 = vmatmul.mubr.f32.gmra.mxu0 %v168
  %v758 = vpop.f32.mrf.mxu0
  %v759 = vadd.f32 0.0, %v758
  %v760 = vpop.f32.mrf.mxu0
  %761 = vmatprep.mubr.f32.mxu0 %v171
  %762 = vmatmul.mubr.f32.gmra.mxu0 %v170
  %v763 = vpop.f32.mrf.mxu0
  %v764 = vadd.f32 0.0, %v763
  %v765 = vpop.f32.mrf.mxu0
  %766 = vdwg.mxu0
  %v767 = vadd.f32 %v690, %v759
  %v768 = vadd.f32 %v691, %v764
  %769 = vst [vmem:[#allocation3] sm:$0xff] %v767
  %770 = vst [vmem:[#allocation3 + $0x8] sm:$0xff] %v768
  // Predicated region
  $region26: #{gcnmax_edge_forward.1} parent=0 // pred_check
    %p771 = pneg %p20
  $region27: #{gcnmax_edge_forward.1} parent=0 // pred_check_branch
    %773 = sbr.rel (%p771) target = $region29
  $region28: #{gcnmax_edge_forward.1} parent=0 // pred_region
    %v774 = vld [vmem:[#allocation2] sm:$0xff]
    %v775 = vld [vmem:[#allocation2 + $0x8] sm:$0xff]
    %vm776 = vcmp.lt.s32.totalorder %v173, 4
    %v777 = vld [vmem:[#allocation3] sm:$0xff]
    %v778 = vld [vmem:[#allocation3 + $0x8] sm:$0xff]
    %v779 = vsel %vm776, %v777, %v774
    %v780 = vsel %vm776, %v778, %v775
    %v781 = vld [vmem:[%s2] sm:$0x1]
    %v783 = vlaneseq
    %v784 = vshrl.u32 %v783, 7
    %v785 = vsub.s32 0, %v784
    %v786 = vrot.slane %v781, %v785
    %v788 = vadd.f32 %v779, %v786
    %v789 = vadd.f32 %v780, %v786
    %v790 = vmax.f32 %v788, 0.0
    %v791 = vmax.f32 %v789, 0.0
    %v792 = vadd.f32 %v790, %v791
    %v793 = vrot.slane %v792, 4
    %v794 = vadd.f32 %v792, %v793
    %v795 = vrot.slane %v794, 2
    %v796 = vadd.f32 %v794, %v795
    %v797 = vrot.slane %v796, 1
    %v798 = vadd.f32 %v796, %v797
    %v799 = vrcp.pop 16.0
    %v800 = vmul.f32 %v798, %v799
    %801 = vst [vmem:[%s5] sm:$0x1] %v800
  $region29: #{gcnmax_edge_forward.1} parent=0 // pred_fallthru
    _
  // Predicated region
  $region30: #{gcnmax_edge_forward.1} parent=0 // pred_check
    _
  $region31: #{gcnmax_edge_forward.1} parent=0 // pred_check_branch
    %803 = sbr.rel (0) target = $region33
  $region32: #{gcnmax_edge_forward.1} parent=0 // pred_region
    _
  $region33: #{gcnmax_edge_forward.1} parent=0 // pred_fallthru
    _
  // Predicated region
  $region34: #{gcnmax_edge_forward.1} parent=0 // pred_check
    _
  $region35: #{gcnmax_edge_forward.1} parent=0 // pred_check_branch
    %805 = sbr.rel (0) target = $region37
  $region36: #{gcnmax_edge_forward.1} parent=0 // pred_region
    _
  $region37: #{gcnmax_edge_forward.1} parent=0 // pred_fallthru
    _

</llo_original>
